<compile_context>
chip_gen: v7x
topology: tpu7x:2x2x1
jax: 0.10.0
libtpu: 0.0.40
codegen_flags: <defaults>
</compile_context>

<pallas_src>
import functools

import jax
import jax.numpy as jnp
from jax.experimental import pallas as pl
from jax.experimental.pallas import tpu as pltpu


def _round_up(x, m):
    return ((x + m - 1) // m) * m


def critic_kernel(xT_ref, w1_ref, b1_ref, w2_ref, b2_ref, o_ref):
    # Upcast the (possibly bf16) x tile; fc1 is one MXU matmul in the
    # transposed layout: (H, S) @ (S, TILE_B) -> (H, TILE_B), f32 accumulate.
    xT = xT_ref[...].astype(jnp.float32)
    h = jnp.dot(w1_ref[...], xT,
                precision=jax.lax.Precision.HIGHEST,
                preferred_element_type=jnp.float32)
    h = jnp.maximum(h + b1_ref[...], 0.0)          # bias broadcasts over lanes
    # fc2 (output width 1): VPU multiply + sublane (XLU) reduce instead of a
    # degenerate N=1 MXU matmul.  Result is a lane-dense (1, TILE_B) row.
    v = jnp.sum(h * w2_ref[...], axis=0, keepdims=True)
    o_ref[...] = v + b2_ref[0, 0]                  # scalar bias from SMEM


def _auto_tile_b(S_pad, H_pad, x_bytes, vmem_budget_bytes):
    """Largest 128-multiple batch tile whose per-step VMEM footprint fits the
    budget.  Per batch column we pay roughly:
      2 * S_pad * x_bytes   x tile, double-buffered by the Pallas pipeline
      S_pad * 4             f32 upcast of the x tile fed to the MXU
      2 * H_pad * 4         (H, TILE_B) f32 hidden activation + elementwise temp
      2 * 8 * 4             (1, TILE_B) f32 output slab (sublane-padded), 2 bufs
    """
    per_col = 2 * S_pad * x_bytes + S_pad * 4 + 2 * H_pad * 4 + 2 * 8 * 4
    return max(128, (vmem_budget_bytes // per_col) // 128 * 128)


@functools.partial(
    jax.jit,
    static_argnames=("tile_b", "x_dtype", "vmem_budget_bytes", "vmem_limit_bytes"))
def critic_net_forward(x, w1, b1, w2, b2, *, tile_b=None, x_dtype=jnp.bfloat16,
                       vmem_budget_bytes=16 * 1024 * 1024,
                       vmem_limit_bytes=32 * 1024 * 1024):
    """x: (B, n_states).  Params in PyTorch nn.Linear layout:
         w1: (n_hidden, n_states), b1: (n_hidden,),
         w2: (1, n_hidden) or (n_hidden,), b2: (1,) or scalar.
       Returns (B, 1) f32 value estimates."""
    B, S = x.shape
    H = w1.shape[0]

    x_dtype = jnp.dtype(x_dtype)
    x_bytes = x_dtype.itemsize
    # Feature dims sit on the sublane axis: 8-row alignment for f32, 16 for
    # bf16 (sublane packing).  Weights stay f32 -> 8-row alignment for H.
    S_pad = _round_up(S, 16 if x_bytes == 2 else 8)
    H_pad = _round_up(H, 8)

    # ---- batch tile sizing (the perf-critical knob) ----
    B_pad128 = _round_up(B, 128)
    if tile_b is None:
        tile_b = _auto_tile_b(S_pad, H_pad, x_bytes, vmem_budget_bytes)
    tile_b = max(128, _round_up(tile_b, 128))
    tile_b = min(tile_b, B_pad128)
    # Prefer >= 2 grid steps when the batch allows: shards the "parallel" axis
    # across both TensorCores on v7x and gives the double-buffer a steady state.
    half = _round_up((B_pad128 + 1) // 2, 128)
    if B_pad128 >= 2 * 128 and tile_b > half:
        tile_b = half
    B_pad = _round_up(B, tile_b)

    f32 = jnp.float32
    # One-time wrapper-side layout plumbing: cast first (halves the bytes the
    # transpose pass moves when x_dtype is bf16), then transpose + zero-pad.
    xT = jnp.pad(x.astype(x_dtype).T, ((0, S_pad - S), (0, B_pad - B)))
    w1p = jnp.pad(w1.astype(f32), ((0, H_pad - H), (0, S_pad - S)))
    b1p = jnp.pad(b1.astype(f32).reshape(-1, 1), ((0, H_pad - H), (0, 0)))
    w2p = jnp.pad(w2.astype(f32).reshape(-1, 1), ((0, H_pad - H), (0, 0)))
    b2p = jnp.asarray(b2, f32).reshape(1, 1)

    grid = (B_pad // tile_b,)
    out = pl.pallas_call(
        critic_kernel,
        out_shape=jax.ShapeDtypeStruct((1, B_pad), f32),
        grid=grid,
        in_specs=[
            # x tile marches over the batch; weights stay resident (block 0).
            pl.BlockSpec((S_pad, tile_b), lambda i: (0, i)),
            pl.BlockSpec((H_pad, S_pad), lambda i: (0, 0)),
            pl.BlockSpec((H_pad, 1), lambda i: (0, 0)),
            pl.BlockSpec((H_pad, 1), lambda i: (0, 0)),
            pl.BlockSpec(memory_space=pltpu.MemorySpace.SMEM),
        ],
        out_specs=pl.BlockSpec((1, tile_b), lambda i: (0, i)),
        compiler_params=pltpu.CompilerParams(
            dimension_semantics=("parallel",),
            vmem_limit_bytes=vmem_limit_bytes),
    )(xT, w1p, b1p, w2p, b2p)

    # Lane-dense (1, B_pad) slab -> (B, 1).  Padded batch columns compute
    # garbage (relu(b1)·w2 + b2); the :B slice below must stay.
    return out[0, :B].reshape(B, 1)


def init_critic_params(key, n_states, n_hidden):
    """torch.nn.Linear default init: U(-1/sqrt(fan_in), 1/sqrt(fan_in)),
    stored in PyTorch (out_features, in_features) layout."""
    k1, k2, k3, k4 = jax.random.split(key, 4)
    bound1 = 1.0 / (n_states ** 0.5)
    bound2 = 1.0 / (n_hidden ** 0.5)
    w1 = jax.random.uniform(k1, (n_hidden, n_states), jnp.float32, -bound1, bound1)
    b1 = jax.random.uniform(k2, (n_hidden,), jnp.float32, -bound1, bound1)
    w2 = jax.random.uniform(k3, (1, n_hidden), jnp.float32, -bound2, bound2)
    b2 = jax.random.uniform(k4, (1,), jnp.float32, -bound2, bound2)
    return w1, b1, w2, b2


if __name__ == "__main__":
    n_states, n_hidden, batch = 8, 32, 4

    key = jax.random.PRNGKey(0)
    pkey, xkey = jax.random.split(key)
    w1, b1, w2, b2 = init_critic_params(pkey, n_states, n_hidden)
    x = jax.random.normal(xkey, (batch, n_states), jnp.float32)

    # Pure-JAX reference of the PyTorch forward: relu(x W1^T + b1) W2^T + b2.
    def ref_forward(xin):
        h = jnp.maximum(
            jnp.dot(xin, w1.T, precision=jax.lax.Precision.HIGHEST) + b1, 0.0)
        return jnp.dot(h, w2.T, precision=jax.lax.Precision.HIGHEST) + b2

    # 1) Default (perf) path: x streamed as bf16, f32 accumulation inside.
    out_bf16 = jax.block_until_ready(critic_net_forward(x, w1, b1, w2, b2))
    assert out_bf16.shape == (batch, 1)
    x_rounded = x.astype(jnp.bfloat16).astype(jnp.float32)
    assert jnp.allclose(out_bf16, ref_forward(x_rounded), atol=1e-4, rtol=1e-4)

    # 2) Exact-f32 parity path (same kernel, x kept in f32).
    out_f32 = jax.block_until_ready(
        critic_net_forward(x, w1, b1, w2, b2, x_dtype=jnp.float32))
    assert out_f32.shape == (batch, 1)
    assert jnp.allclose(out_f32, ref_forward(x), atol=1e-5, rtol=1e-5)

    print("KERNEL_OK")
</pallas_src>

<mosaic_0001>
module attributes {stable_mosaic.version = 11 : i64} {
  func.func @critic_kernel(%arg0: i32, %arg1: memref<16x128xbf16, #tpu.memory_space<vmem>>, %arg2: memref<32x16xf32, #tpu.memory_space<vmem>>, %arg3: memref<32x1xf32, #tpu.memory_space<vmem>>, %arg4: memref<32x1xf32, #tpu.memory_space<vmem>>, %arg5: memref<1x1xf32, #tpu.memory_space<smem>>, %arg6: memref<1x128xf32, #tpu.memory_space<vmem>>) attributes {dimension_semantics = [#tpu.dimension_semantics<parallel>], iteration_bounds = array<i64: 1>, scalar_prefetch = 0 : i64, scratch_operands = 0 : i64, tpu.core_type = #tpu.core_type<tc>, window_params = [{transform_indices = @transform_0, window_bounds = array<i64: 16, 128>}, {pipeline_mode = #tpu.pipeline_mode<synchronous>, transform_indices = @transform_1, window_bounds = array<i64: 32, 16>}, {pipeline_mode = #tpu.pipeline_mode<synchronous>, transform_indices = @transform_2, window_bounds = array<i64: 32, 1>}, {pipeline_mode = #tpu.pipeline_mode<synchronous>, transform_indices = @transform_3, window_bounds = array<i64: 32, 1>}, {transform_indices = @transform_4, window_bounds = array<i64: 1, 1>}, {transform_indices = @transform_5, window_bounds = array<i64: 1, 128>}]} {
    %c0 = arith.constant 0 : index
    %c0_0 = arith.constant 0 : index
    %0 = vector.load %arg1[%c0, %c0_0] : memref<16x128xbf16, #tpu.memory_space<vmem>>, vector<16x128xbf16>
    %1 = arith.extf %0 : vector<16x128xbf16> to vector<16x128xf32>
    %c0_1 = arith.constant 0 : index
    %c0_2 = arith.constant 0 : index
    %2 = vector.load %arg2[%c0_1, %c0_2] : memref<32x16xf32, #tpu.memory_space<vmem>>, vector<32x16xf32>
    %cst = arith.constant dense<0.000000e+00> : vector<32x128xf32>
    %3 = tpu.matmul %2, %1, %cst {dimension_numbers = #tpu.dot_dimension_numbers<[1], [0], [0], [1], [0, 0, 1, 1], [], []>, precision = #tpu.contract_precision<fp32>} : vector<32x16xf32>, vector<16x128xf32>, vector<32x128xf32> -> vector<32x128xf32>
    %c0_3 = arith.constant 0 : index
    %c0_4 = arith.constant 0 : index
    %4 = vector.load %arg3[%c0_3, %c0_4] : memref<32x1xf32, #tpu.memory_space<vmem>>, vector<32x1xf32>
    %5 = vector.broadcast %4 : vector<32x1xf32> to vector<32x128xf32>
    %6 = arith.addf %3, %5 : vector<32x128xf32>
    %cst_5 = arith.constant 0.000000e+00 : f32
    %7 = vector.broadcast %cst_5 : f32 to vector<32x128xf32>
    %8 = arith.maximumf %6, %7 : vector<32x128xf32>
    %c0_6 = arith.constant 0 : index
    %c0_7 = arith.constant 0 : index
    %9 = vector.load %arg4[%c0_6, %c0_7] : memref<32x1xf32, #tpu.memory_space<vmem>>, vector<32x1xf32>
    %10 = vector.broadcast %9 : vector<32x1xf32> to vector<32x128xf32>
    %11 = arith.mulf %8, %10 : vector<32x128xf32>
    %cst_8 = arith.constant dense<0.000000e+00> : vector<128xf32>
    %12 = vector.multi_reduction <add>, %11, %cst_8 [0] : vector<32x128xf32> to vector<128xf32>
    %13 = vector.shape_cast %12 : vector<128xf32> to vector<1x128xf32>
    %c0_9 = arith.constant 0 : index
    %c0_10 = arith.constant 0 : index
    %14 = memref.load %arg5[%c0_9, %c0_10] : memref<1x1xf32, #tpu.memory_space<smem>>
    %15 = vector.broadcast %14 : f32 to vector<1x128xf32>
    %16 = arith.addf %13, %15 : vector<1x128xf32>
    %c0_11 = arith.constant 0 : index
    %c0_12 = arith.constant 0 : index
    %17 = vector.load %arg6[%c0_11, %c0_12] : memref<1x128xf32, #tpu.memory_space<vmem>>, vector<1x128xf32>
    tpu.vector_store %arg6[%c0_11, %c0_12], %16 {strides = array<i32>} : memref<1x128xf32, #tpu.memory_space<vmem>>, vector<1x128xf32>,
    return
  }
  func.func @transform_0(%arg0: i32) -> (i32, i32) {
    %c0_i32 = arith.constant 0 : i32
    %c0_i32_0 = arith.constant 0 : i32
    return %c0_i32, %arg0 : i32, i32
  }
  func.func @transform_1(%arg0: i32) -> (i32, i32) {
    %c0_i32 = arith.constant 0 : i32
    %c0_i32_0 = arith.constant 0 : i32
    %c0_i32_1 = arith.constant 0 : i32
    return %c0_i32, %c0_i32_0 : i32, i32
  }
  func.func @transform_2(%arg0: i32) -> (i32, i32) {
    %c0_i32 = arith.constant 0 : i32
    %c0_i32_0 = arith.constant 0 : i32
    %c0_i32_1 = arith.constant 0 : i32
    return %c0_i32, %c0_i32_0 : i32, i32
  }
  func.func @transform_3(%arg0: i32) -> (i32, i32) {
    %c0_i32 = arith.constant 0 : i32
    %c0_i32_0 = arith.constant 0 : i32
    %c0_i32_1 = arith.constant 0 : i32
    return %c0_i32, %c0_i32_0 : i32, i32
  }
  func.func @transform_4(%arg0: i32) -> (i32, i32) {
    %c0_i32 = arith.constant 0 : i32
    %c0_i32_0 = arith.constant 0 : i32
    %c0_i32_1 = arith.constant 0 : i32
    return %c0_i32, %c0_i32_0 : i32, i32
  }
  func.func @transform_5(%arg0: i32) -> (i32, i32) {
    %c0_i32 = arith.constant 0 : i32
    %c0_i32_0 = arith.constant 0 : i32
    return %c0_i32, %arg0 : i32, i32
  }
}

</mosaic_0001>

<llo_original>
// kernel: critic_net_forward.1
$region0: #{critic_net_forward.1}
  #allocation0 [shape = 'u32[]', space=smem, size = 0x4, offset = 0x4, fixed_abs, tag = 'smem constant byte address 0x4 - core index']
  #allocation1 [shape = 'u32[144,128]{1,0:T(1,128)}', space=vmem, size = 0x12000, scoped, tag = 'internal scratch']
  #allocation2 [shape = 'f32[1,1]{1,0:T(1,128)S(6)}', space=smem, size = 0x200, scoped, tag = 'scoped memory for critic_net_forward.1']
  %s0 = inlined_call_operand.vmem [shape: bf16[16,128], index: 0, kind: input, shape index: {}]
  %s1 = inlined_call_operand.vmem [shape: f32[32,16], index: 1, kind: input, shape index: {}]
  %s2 = inlined_call_operand.vmem [shape: f32[32,1], index: 2, kind: input, shape index: {}]
  %s3 = inlined_call_operand.vmem [shape: f32[32,1], index: 3, kind: input, shape index: {}]
  %s4 = inlined_call_operand.<no memory space> [shape: f32[1,1], index: 4, kind: input, shape index: {}]
  %s5 = inlined_call_operand.vmem [shape: f32[1,128], index: 5, kind: output, shape index: {}]
  %s6 = sld [smem:[#allocation0]]
  $region30: #{critic_net_forward.1} parent=0
    _
  %s8 = ssub.s32 1, %s6
  %s9 = scalar_select 0, %s8, %s6
  %10 = sst [smem:[#allocation2]] %s4
  // Predicated region
  $region2: #{critic_net_forward.1} parent=0 // pred_check
    _
  $region3: #{critic_net_forward.1} parent=0 // pred_check_branch
    %12 = sbr.rel (0) target = $region5
  $region4: #{critic_net_forward.1} parent=0 // pred_region
    _
  $region5: #{critic_net_forward.1} parent=0 // pred_fallthru
    _
  // Predicated region
  $region6: #{critic_net_forward.1} parent=0 // pred_check
    _
  $region7: #{critic_net_forward.1} parent=0 // pred_check_branch
    %14 = sbr.rel (0) target = $region9
  $region8: #{critic_net_forward.1} parent=0 // pred_region
    _
  $region9: #{critic_net_forward.1} parent=0 // pred_fallthru
    _
  // Predicated region
  $region10: #{critic_net_forward.1} parent=0 // pred_check
    _
  $region11: #{critic_net_forward.1} parent=0 // pred_check_branch
    %16 = sbr.rel (0) target = $region13
  $region12: #{critic_net_forward.1} parent=0 // pred_region
    _
  $region13: #{critic_net_forward.1} parent=0 // pred_fallthru
    _
  // Predicated region
  $region14: #{critic_net_forward.1} parent=0 // pred_check
    _
  $region15: #{critic_net_forward.1} parent=0 // pred_check_branch
    %18 = sbr.rel (0) target = $region17
  $region16: #{critic_net_forward.1} parent=0 // pred_region
    _
  $region17: #{critic_net_forward.1} parent=0 // pred_fallthru
    _
  // Predicated region
  $region18: #{critic_net_forward.1} parent=0 // pred_check
    _
  $region19: #{critic_net_forward.1} parent=0 // pred_check_branch
    %20 = sbr.rel (0) target = $region21
  $region20: #{critic_net_forward.1} parent=0 // pred_region
    _
  $region21: #{critic_net_forward.1} parent=0 // pred_fallthru
    _
  %v21 = vld [vmem:[%s0] sm:$0xf]
  %v22 = vld [vmem:[%s0 + $0x4] sm:$0xf]
  %v23 = vunpack.c.l.bf16 %v21
  %v24 = vunpack.c.l.bf16 %v22
  %v25 = vld [vmem:[%s1] sm:$0xff]
  %v26 = vld [vmem:[%s1 + $0x8] sm:$0xff]
  %v27 = vld [vmem:[%s1 + $0x10] sm:$0xff]
  %v28 = vld [vmem:[%s1 + $0x18] sm:$0xff]
  %v29 = vld [vmem:[%s2] sm:$0xff]
  %v30 = vld [vmem:[%s2 + $0x8] sm:$0xff]
  %v31 = vld [vmem:[%s2 + $0x10] sm:$0xff]
  %v32 = vld [vmem:[%s2 + $0x18] sm:$0xff]
  %34 = vset.pattern.permute.xlu0 0
  %35 = vperm.xlu0 %34, %v29
  %v36 = vpop.permute.xlu0 %35
  %39 = vset.pattern.permute.xlu0 0
  %40 = vperm.xlu0 %39, %v30
  %v41 = vpop.permute.xlu0 %40
  %44 = vset.pattern.permute.xlu0 0
  %45 = vperm.xlu0 %44, %v31
  %v46 = vpop.permute.xlu0 %45
  %49 = vset.pattern.permute.xlu0 0
  %50 = vperm.xlu0 %49, %v32
  %v51 = vpop.permute.xlu0 %50
  %vm53 = vcmask 130048
  %v55 = vsel %vm53, %v25, 0
  %v58 = vsel %vm53, %v26, 0
  %v61 = vsel %vm53, %v27, 0
  %v64 = vsel %vm53, %v28, 0
  %66 = vmatprep.subr.mxu0 0.0
  %67 = vmatpush1.msra.mxu0 %v23
  %68 = vmatprep.subr.mxu0 0.0
  %69 = vmatpush1.msra.mxu0 %v24
  %70 = vmatprep.subr.mxu0 0.0
  %71 = vmatpush1.msra.mxu0 0.0
  %72 = vmatprep.subr.mxu0 0.0
  %73 = vmatpush1.msra.mxu0 0.0
  %74 = vmatprep.subr.mxu0 0.0
  %75 = vmatpush1.msra.mxu0 0.0
  %76 = vmatprep.subr.mxu0 0.0
  %77 = vmatpush1.msra.mxu0 0.0
  %78 = vmatprep.subr.mxu0 0.0
  %79 = vmatpush1.msra.mxu0 0.0
  %80 = vmatprep.subr.mxu0 0.0
  %81 = vmatpush1.msra.mxu0 0.0
  %82 = vmatprep.subr.mxu0 0.0
  %83 = vmatpush1.msra.mxu0 0.0
  %84 = vmatprep.subr.mxu0 0.0
  %85 = vmatpush1.msra.mxu0 0.0
  %86 = vmatprep.subr.mxu0 0.0
  %87 = vmatpush1.msra.mxu0 0.0
  %88 = vmatprep.subr.mxu0 0.0
  %89 = vmatpush1.msra.mxu0 0.0
  %90 = vmatprep.subr.mxu0 0.0
  %91 = vmatpush1.msra.mxu0 0.0
  %92 = vmatprep.subr.mxu0 0.0
  %93 = vmatpush1.msra.mxu0 0.0
  %94 = vmatprep.subr.mxu0 0.0
  %95 = vmatpush1.msra.mxu0 0.0
  %96 = vmatprep.subr.mxu0 0.0
  %97 = vmatpush1.msra.mxu0 0.0
  %98 = vmatprep.subr.mxu0 0.0
  %99 = vmatpush1.msra.mxu0 0.0
  %100 = vmatprep.subr.mxu0 0.0
  %101 = vmatpush1.msra.mxu0 0.0
  %102 = vmatprep.subr.mxu0 0.0
  %103 = vmatpush1.msra.mxu0 0.0
  %104 = vmatprep.subr.mxu0 0.0
  %105 = vmatpush1.msra.mxu0 0.0
  %106 = vmatprep.subr.mxu0 0.0
  %107 = vmatpush1.msra.mxu0 0.0
  %108 = vmatprep.subr.mxu0 0.0
  %109 = vmatpush1.msra.mxu0 0.0
  %110 = vmatprep.subr.mxu0 0.0
  %111 = vmatpush1.msra.mxu0 0.0
  %112 = vmatprep.subr.mxu0 0.0
  %113 = vmatpush1.msra.mxu0 0.0
  %114 = vmatprep.subr.mxu0 0.0
  %115 = vmatpush1.msra.mxu0 0.0
  %116 = vmatprep.subr.mxu0 0.0
  %117 = vmatpush1.msra.mxu0 0.0
  %118 = vmatprep.subr.mxu0 0.0
  %119 = vmatpush1.msra.mxu0 0.0
  %120 = vmatprep.subr.mxu0 0.0
  %121 = vmatpush1.msra.mxu0 0.0
  %122 = vmatprep.subr.mxu0 0.0
  %123 = vmatpush1.msra.mxu0 0.0
  %124 = vmatprep.subr.mxu0 0.0
  %125 = vmatpush1.msra.mxu0 0.0
  %126 = vmatprep.subr.mxu0 0.0
  %127 = vmatpush1.msra.mxu0 0.0
  %128 = vmatprep.subr.mxu0 0.0
  %129 = vmatpush1.msra.mxu0 0.0
  %130 = vmatprep.mubr.f32.mxu0 0.0
  %v131 = vand.u32 %v55, 4294901760
  %v132 = vsub.f32 %v55, %v131
  %v133 = vand.u32 %v132, 4294901760
  %v134 = vsub.f32 %v132, %v133
  %v135 = vand.u32 %v134, 4294901760
  %136 = vmatmul.mubr.f32.gmra.mrb[0].mxu0 %v135
  %v137 = vpop.f32.mrb[0].mxu0
  %v138 = vadd.f32 %v36, %v137
  %v139 = vpop.f32.mrb[0].mxu0
  %140 = vmatprep.mubr.f32.mxu0 0.0
  %v141 = vand.u32 %v58, 4294901760
  %v142 = vsub.f32 %v58, %v141
  %v143 = vand.u32 %v142, 4294901760
  %v144 = vsub.f32 %v142, %v143
  %v145 = vand.u32 %v144, 4294901760
  %146 = vmatmul.mubr.f32.gmra.mrb[0].mxu0 %v145
  %v147 = vpop.f32.mrb[0].mxu0
  %v148 = vadd.f32 %v41, %v147
  %v149 = vpop.f32.mrb[0].mxu0
  %150 = vmatprep.mubr.f32.mxu0 0.0
  %v151 = vand.u32 %v61, 4294901760
  %v152 = vsub.f32 %v61, %v151
  %v153 = vand.u32 %v152, 4294901760
  %v154 = vsub.f32 %v152, %v153
  %v155 = vand.u32 %v154, 4294901760
  %156 = vmatmul.mubr.f32.gmra.mrb[0].mxu0 %v155
  %v157 = vpop.f32.mrb[0].mxu0
  %v158 = vadd.f32 %v46, %v157
  %v159 = vpop.f32.mrb[0].mxu0
  %160 = vmatprep.mubr.f32.mxu0 0.0
  %v161 = vand.u32 %v64, 4294901760
  %v162 = vsub.f32 %v64, %v161
  %v163 = vand.u32 %v162, 4294901760
  %v164 = vsub.f32 %v162, %v163
  %v165 = vand.u32 %v164, 4294901760
  %166 = vmatmul.mubr.f32.gmra.mrb[0].mxu0 %v165
  %v167 = vpop.f32.mrb[0].mxu0
  %v168 = vadd.f32 %v51, %v167
  %v169 = vpop.f32.mrb[0].mxu0
  %170 = vdwg.mxu0
  %171 = vmatprep.subr.mxu0 0.0
  %v172 = vsub.f32 %v23, %v23
  %v173 = vand.u32 %v172, 4294901760
  %v174 = vsub.f32 %v172, %v173
  %v175 = vand.u32 %v174, 4294901760
  %176 = vmatpush1.msra.mxu0 %v175
  %177 = vmatprep.subr.mxu0 0.0
  %v178 = vsub.f32 %v24, %v24
  %v179 = vand.u32 %v178, 4294901760
  %v180 = vsub.f32 %v178, %v179
  %v181 = vand.u32 %v180, 4294901760
  %182 = vmatpush1.msra.mxu0 %v181
  %183 = vmatprep.subr.mxu0 0.0
  %184 = vmatpush1.msra.mxu0 0.0
  %185 = vmatprep.subr.mxu0 0.0
  %186 = vmatpush1.msra.mxu0 0.0
  %187 = vmatprep.subr.mxu0 0.0
  %188 = vmatpush1.msra.mxu0 0.0
  %189 = vmatprep.subr.mxu0 0.0
  %190 = vmatpush1.msra.mxu0 0.0
  %191 = vmatprep.subr.mxu0 0.0
  %192 = vmatpush1.msra.mxu0 0.0
  %193 = vmatprep.subr.mxu0 0.0
  %194 = vmatpush1.msra.mxu0 0.0
  %195 = vmatprep.subr.mxu0 0.0
  %196 = vmatpush1.msra.mxu0 0.0
  %197 = vmatprep.subr.mxu0 0.0
  %198 = vmatpush1.msra.mxu0 0.0
  %199 = vmatprep.subr.mxu0 0.0
  %200 = vmatpush1.msra.mxu0 0.0
  %201 = vmatprep.subr.mxu0 0.0
  %202 = vmatpush1.msra.mxu0 0.0
  %203 = vmatprep.subr.mxu0 0.0
  %204 = vmatpush1.msra.mxu0 0.0
  %205 = vmatprep.subr.mxu0 0.0
  %206 = vmatpush1.msra.mxu0 0.0
  %207 = vmatprep.subr.mxu0 0.0
  %208 = vmatpush1.msra.mxu0 0.0
  %209 = vmatprep.subr.mxu0 0.0
  %210 = vmatpush1.msra.mxu0 0.0
  %211 = vmatprep.subr.mxu0 0.0
  %212 = vmatpush1.msra.mxu0 0.0
  %213 = vmatprep.subr.mxu0 0.0
  %214 = vmatpush1.msra.mxu0 0.0
  %215 = vmatprep.subr.mxu0 0.0
  %216 = vmatpush1.msra.mxu0 0.0
  %217 = vmatprep.subr.mxu0 0.0
  %218 = vmatpush1.msra.mxu0 0.0
  %219 = vmatprep.subr.mxu0 0.0
  %220 = vmatpush1.msra.mxu0 0.0
  %221 = vmatprep.subr.mxu0 0.0
  %222 = vmatpush1.msra.mxu0 0.0
  %223 = vmatprep.subr.mxu0 0.0
  %224 = vmatpush1.msra.mxu0 0.0
  %225 = vmatprep.subr.mxu0 0.0
  %226 = vmatpush1.msra.mxu0 0.0
  %227 = vmatprep.subr.mxu0 0.0
  %228 = vmatpush1.msra.mxu0 0.0
  %229 = vmatprep.subr.mxu0 0.0
  %230 = vmatpush1.msra.mxu0 0.0
  %231 = vmatprep.subr.mxu0 0.0
  %232 = vmatpush1.msra.mxu0 0.0
  %233 = vmatprep.subr.mxu0 0.0
  %234 = vmatpush1.msra.mxu0 0.0
  %235 = vmatprep.subr.mxu0 0.0
  %236 = vmatpush1.msra.mxu0 0.0
  %237 = vmatprep.subr.mxu0 0.0
  %238 = vmatpush1.msra.mxu0 0.0
  %239 = vmatprep.subr.mxu0 0.0
  %240 = vmatpush1.msra.mxu0 0.0
  %241 = vmatprep.subr.mxu0 0.0
  %242 = vmatpush1.msra.mxu0 0.0
  %243 = vmatprep.mubr.f32.mxu0 0.0
  %v244 = vand.u32 %v55, 4294901760
  %245 = vmatmul.mubr.f32.gmra.mrb[0].mxu0 %v244
  %v246 = vpop.f32.mrb[0].mxu0
  %v247 = vadd.f32 %v138, %v246
  %v248 = vpop.f32.mrb[0].mxu0
  %249 = vmatprep.mubr.f32.mxu0 0.0
  %v250 = vand.u32 %v58, 4294901760
  %251 = vmatmul.mubr.f32.gmra.mrb[0].mxu0 %v250
  %v252 = vpop.f32.mrb[0].mxu0
  %v253 = vadd.f32 %v148, %v252
  %v254 = vpop.f32.mrb[0].mxu0
  %255 = vmatprep.mubr.f32.mxu0 0.0
  %v256 = vand.u32 %v61, 4294901760
  %257 = vmatmul.mubr.f32.gmra.mrb[0].mxu0 %v256
  %v258 = vpop.f32.mrb[0].mxu0
  %v259 = vadd.f32 %v158, %v258
  %v260 = vpop.f32.mrb[0].mxu0
  %261 = vmatprep.mubr.f32.mxu0 0.0
  %v262 = vand.u32 %v64, 4294901760
  %263 = vmatmul.mubr.f32.gmra.mrb[0].mxu0 %v262
  %v264 = vpop.f32.mrb[0].mxu0
  %v265 = vadd.f32 %v168, %v264
  %v266 = vpop.f32.mrb[0].mxu0
  %267 = vdwg.mxu0
  %268 = vmatprep.subr.mxu0 0.0
  %v269 = vsub.f32 %v23, %v23
  %270 = vmatpush1.msra.mxu0 %v269
  %271 = vmatprep.subr.mxu0 0.0
  %v272 = vsub.f32 %v24, %v24
  %273 = vmatpush1.msra.mxu0 %v272
  %274 = vmatprep.subr.mxu0 0.0
  %275 = vmatpush1.msra.mxu0 0.0
  %276 = vmatprep.subr.mxu0 0.0
  %277 = vmatpush1.msra.mxu0 0.0
  %278 = vmatprep.subr.mxu0 0.0
  %279 = vmatpush1.msra.mxu0 0.0
  %280 = vmatprep.subr.mxu0 0.0
  %281 = vmatpush1.msra.mxu0 0.0
  %282 = vmatprep.subr.mxu0 0.0
  %283 = vmatpush1.msra.mxu0 0.0
  %284 = vmatprep.subr.mxu0 0.0
  %285 = vmatpush1.msra.mxu0 0.0
  %286 = vmatprep.subr.mxu0 0.0
  %287 = vmatpush1.msra.mxu0 0.0
  %288 = vmatprep.subr.mxu0 0.0
  %289 = vmatpush1.msra.mxu0 0.0
  %290 = vmatprep.subr.mxu0 0.0
  %291 = vmatpush1.msra.mxu0 0.0
  %292 = vmatprep.subr.mxu0 0.0
  %293 = vmatpush1.msra.mxu0 0.0
  %294 = vmatprep.subr.mxu0 0.0
  %295 = vmatpush1.msra.mxu0 0.0
  %296 = vmatprep.subr.mxu0 0.0
  %297 = vmatpush1.msra.mxu0 0.0
  %298 = vmatprep.subr.mxu0 0.0
  %299 = vmatpush1.msra.mxu0 0.0
  %300 = vmatprep.subr.mxu0 0.0
  %301 = vmatpush1.msra.mxu0 0.0
  %302 = vmatprep.subr.mxu0 0.0
  %303 = vmatpush1.msra.mxu0 0.0
  %304 = vmatprep.subr.mxu0 0.0
  %305 = vmatpush1.msra.mxu0 0.0
  %306 = vmatprep.subr.mxu0 0.0
  %307 = vmatpush1.msra.mxu0 0.0
  %308 = vmatprep.subr.mxu0 0.0
  %309 = vmatpush1.msra.mxu0 0.0
  %310 = vmatprep.subr.mxu0 0.0
  %311 = vmatpush1.msra.mxu0 0.0
  %312 = vmatprep.subr.mxu0 0.0
  %313 = vmatpush1.msra.mxu0 0.0
  %314 = vmatprep.subr.mxu0 0.0
  %315 = vmatpush1.msra.mxu0 0.0
  %316 = vmatprep.subr.mxu0 0.0
  %317 = vmatpush1.msra.mxu0 0.0
  %318 = vmatprep.subr.mxu0 0.0
  %319 = vmatpush1.msra.mxu0 0.0
  %320 = vmatprep.subr.mxu0 0.0
  %321 = vmatpush1.msra.mxu0 0.0
  %322 = vmatprep.subr.mxu0 0.0
  %323 = vmatpush1.msra.mxu0 0.0
  %324 = vmatprep.subr.mxu0 0.0
  %325 = vmatpush1.msra.mxu0 0.0
  %326 = vmatprep.subr.mxu0 0.0
  %327 = vmatpush1.msra.mxu0 0.0
  %328 = vmatprep.subr.mxu0 0.0
  %329 = vmatpush1.msra.mxu0 0.0
  %330 = vmatprep.subr.mxu0 0.0
  %331 = vmatpush1.msra.mxu0 0.0
  %332 = vmatprep.subr.mxu0 0.0
  %333 = vmatpush1.msra.mxu0 0.0
  %334 = vmatprep.mubr.f32.mxu0 0.0
  %v335 = vand.u32 %v55, 4294901760
  %v336 = vsub.f32 %v55, %v335
  %337 = vmatmul.mubr.f32.gmra.mrb[0].mxu0 %v336
  %v338 = vpop.f32.mrb[0].mxu0
  %v339 = vadd.f32 %v247, %v338
  %v340 = vpop.f32.mrb[0].mxu0
  %341 = vmatprep.mubr.f32.mxu0 0.0
  %v342 = vand.u32 %v58, 4294901760
  %v343 = vsub.f32 %v58, %v342
  %344 = vmatmul.mubr.f32.gmra.mrb[0].mxu0 %v343
  %v345 = vpop.f32.mrb[0].mxu0
  %v346 = vadd.f32 %v253, %v345
  %v347 = vpop.f32.mrb[0].mxu0
  %348 = vmatprep.mubr.f32.mxu0 0.0
  %v349 = vand.u32 %v61, 4294901760
  %v350 = vsub.f32 %v61, %v349
  %351 = vmatmul.mubr.f32.gmra.mrb[0].mxu0 %v350
  %v352 = vpop.f32.mrb[0].mxu0
  %v353 = vadd.f32 %v259, %v352
  %v354 = vpop.f32.mrb[0].mxu0
  %355 = vmatprep.mubr.f32.mxu0 0.0
  %v356 = vand.u32 %v64, 4294901760
  %v357 = vsub.f32 %v64, %v356
  %358 = vmatmul.mubr.f32.gmra.mrb[0].mxu0 %v357
  %v359 = vpop.f32.mrb[0].mxu0
  %v360 = vadd.f32 %v265, %v359
  %v361 = vpop.f32.mrb[0].mxu0
  %362 = vdwg.mxu0
  %363 = vmatprep.subr.mxu0 0.0
  %364 = vmatpush1.msra.mxu0 %v23
  %365 = vmatprep.subr.mxu0 0.0
  %366 = vmatpush1.msra.mxu0 %v24
  %367 = vmatprep.subr.mxu0 0.0
  %368 = vmatpush1.msra.mxu0 0.0
  %369 = vmatprep.subr.mxu0 0.0
  %370 = vmatpush1.msra.mxu0 0.0
  %371 = vmatprep.subr.mxu0 0.0
  %372 = vmatpush1.msra.mxu0 0.0
  %373 = vmatprep.subr.mxu0 0.0
  %374 = vmatpush1.msra.mxu0 0.0
  %375 = vmatprep.subr.mxu0 0.0
  %376 = vmatpush1.msra.mxu0 0.0
  %377 = vmatprep.subr.mxu0 0.0
  %378 = vmatpush1.msra.mxu0 0.0
  %379 = vmatprep.subr.mxu0 0.0
  %380 = vmatpush1.msra.mxu0 0.0
  %381 = vmatprep.subr.mxu0 0.0
  %382 = vmatpush1.msra.mxu0 0.0
  %383 = vmatprep.subr.mxu0 0.0
  %384 = vmatpush1.msra.mxu0 0.0
  %385 = vmatprep.subr.mxu0 0.0
  %386 = vmatpush1.msra.mxu0 0.0
  %387 = vmatprep.subr.mxu0 0.0
  %388 = vmatpush1.msra.mxu0 0.0
  %389 = vmatprep.subr.mxu0 0.0
  %390 = vmatpush1.msra.mxu0 0.0
  %391 = vmatprep.subr.mxu0 0.0
  %392 = vmatpush1.msra.mxu0 0.0
  %393 = vmatprep.subr.mxu0 0.0
  %394 = vmatpush1.msra.mxu0 0.0
  %395 = vmatprep.subr.mxu0 0.0
  %396 = vmatpush1.msra.mxu0 0.0
  %397 = vmatprep.subr.mxu0 0.0
  %398 = vmatpush1.msra.mxu0 0.0
  %399 = vmatprep.subr.mxu0 0.0
  %400 = vmatpush1.msra.mxu0 0.0
  %401 = vmatprep.subr.mxu0 0.0
  %402 = vmatpush1.msra.mxu0 0.0
  %403 = vmatprep.subr.mxu0 0.0
  %404 = vmatpush1.msra.mxu0 0.0
  %405 = vmatprep.subr.mxu0 0.0
  %406 = vmatpush1.msra.mxu0 0.0
  %407 = vmatprep.subr.mxu0 0.0
  %408 = vmatpush1.msra.mxu0 0.0
  %409 = vmatprep.subr.mxu0 0.0
  %410 = vmatpush1.msra.mxu0 0.0
  %411 = vmatprep.subr.mxu0 0.0
  %412 = vmatpush1.msra.mxu0 0.0
  %413 = vmatprep.subr.mxu0 0.0
  %414 = vmatpush1.msra.mxu0 0.0
  %415 = vmatprep.subr.mxu0 0.0
  %416 = vmatpush1.msra.mxu0 0.0
  %417 = vmatprep.subr.mxu0 0.0
  %418 = vmatpush1.msra.mxu0 0.0
  %419 = vmatprep.subr.mxu0 0.0
  %420 = vmatpush1.msra.mxu0 0.0
  %421 = vmatprep.subr.mxu0 0.0
  %422 = vmatpush1.msra.mxu0 0.0
  %423 = vmatprep.subr.mxu0 0.0
  %424 = vmatpush1.msra.mxu0 0.0
  %425 = vmatprep.subr.mxu0 0.0
  %426 = vmatpush1.msra.mxu0 0.0
  %427 = vmatprep.mubr.f32.mxu0 0.0
  %v428 = vand.u32 %v55, 4294901760
  %v429 = vsub.f32 %v55, %v428
  %v430 = vand.u32 %v429, 4294901760
  %431 = vmatmul.mubr.f32.gmra.mrb[0].mxu0 %v430
  %v432 = vpop.f32.mrb[0].mxu0
  %v433 = vadd.f32 %v339, %v432
  %v434 = vpop.f32.mrb[0].mxu0
  %435 = vmatprep.mubr.f32.mxu0 0.0
  %v436 = vand.u32 %v58, 4294901760
  %v437 = vsub.f32 %v58, %v436
  %v438 = vand.u32 %v437, 4294901760
  %439 = vmatmul.mubr.f32.gmra.mrb[0].mxu0 %v438
  %v440 = vpop.f32.mrb[0].mxu0
  %v441 = vadd.f32 %v346, %v440
  %v442 = vpop.f32.mrb[0].mxu0
  %443 = vmatprep.mubr.f32.mxu0 0.0
  %v444 = vand.u32 %v61, 4294901760
  %v445 = vsub.f32 %v61, %v444
  %v446 = vand.u32 %v445, 4294901760
  %447 = vmatmul.mubr.f32.gmra.mrb[0].mxu0 %v446
  %v448 = vpop.f32.mrb[0].mxu0
  %v449 = vadd.f32 %v353, %v448
  %v450 = vpop.f32.mrb[0].mxu0
  %451 = vmatprep.mubr.f32.mxu0 0.0
  %v452 = vand.u32 %v64, 4294901760
  %v453 = vsub.f32 %v64, %v452
  %v454 = vand.u32 %v453, 4294901760
  %455 = vmatmul.mubr.f32.gmra.mrb[0].mxu0 %v454
  %v456 = vpop.f32.mrb[0].mxu0
  %v457 = vadd.f32 %v360, %v456
  %v458 = vpop.f32.mrb[0].mxu0
  %459 = vdwg.mxu0
  %460 = vmatprep.subr.mxu0 0.0
  %v461 = vsub.f32 %v23, %v23
  %v462 = vand.u32 %v461, 4294901760
  %463 = vmatpush1.msra.mxu0 %v462
  %464 = vmatprep.subr.mxu0 0.0
  %v465 = vsub.f32 %v24, %v24
  %v466 = vand.u32 %v465, 4294901760
  %467 = vmatpush1.msra.mxu0 %v466
  %468 = vmatprep.subr.mxu0 0.0
  %469 = vmatpush1.msra.mxu0 0.0
  %470 = vmatprep.subr.mxu0 0.0
  %471 = vmatpush1.msra.mxu0 0.0
  %472 = vmatprep.subr.mxu0 0.0
  %473 = vmatpush1.msra.mxu0 0.0
  %474 = vmatprep.subr.mxu0 0.0
  %475 = vmatpush1.msra.mxu0 0.0
  %476 = vmatprep.subr.mxu0 0.0
  %477 = vmatpush1.msra.mxu0 0.0
  %478 = vmatprep.subr.mxu0 0.0
  %479 = vmatpush1.msra.mxu0 0.0
  %480 = vmatprep.subr.mxu0 0.0
  %481 = vmatpush1.msra.mxu0 0.0
  %482 = vmatprep.subr.mxu0 0.0
  %483 = vmatpush1.msra.mxu0 0.0
  %484 = vmatprep.subr.mxu0 0.0
  %485 = vmatpush1.msra.mxu0 0.0
  %486 = vmatprep.subr.mxu0 0.0
  %487 = vmatpush1.msra.mxu0 0.0
  %488 = vmatprep.subr.mxu0 0.0
  %489 = vmatpush1.msra.mxu0 0.0
  %490 = vmatprep.subr.mxu0 0.0
  %491 = vmatpush1.msra.mxu0 0.0
  %492 = vmatprep.subr.mxu0 0.0
  %493 = vmatpush1.msra.mxu0 0.0
  %494 = vmatprep.subr.mxu0 0.0
  %495 = vmatpush1.msra.mxu0 0.0
  %496 = vmatprep.subr.mxu0 0.0
  %497 = vmatpush1.msra.mxu0 0.0
  %498 = vmatprep.subr.mxu0 0.0
  %499 = vmatpush1.msra.mxu0 0.0
  %500 = vmatprep.subr.mxu0 0.0
  %501 = vmatpush1.msra.mxu0 0.0
  %502 = vmatprep.subr.mxu0 0.0
  %503 = vmatpush1.msra.mxu0 0.0
  %504 = vmatprep.subr.mxu0 0.0
  %505 = vmatpush1.msra.mxu0 0.0
  %506 = vmatprep.subr.mxu0 0.0
  %507 = vmatpush1.msra.mxu0 0.0
  %508 = vmatprep.subr.mxu0 0.0
  %509 = vmatpush1.msra.mxu0 0.0
  %510 = vmatprep.subr.mxu0 0.0
  %511 = vmatpush1.msra.mxu0 0.0
  %512 = vmatprep.subr.mxu0 0.0
  %513 = vmatpush1.msra.mxu0 0.0
  %514 = vmatprep.subr.mxu0 0.0
  %515 = vmatpush1.msra.mxu0 0.0
  %516 = vmatprep.subr.mxu0 0.0
  %517 = vmatpush1.msra.mxu0 0.0
  %518 = vmatprep.subr.mxu0 0.0
  %519 = vmatpush1.msra.mxu0 0.0
  %520 = vmatprep.subr.mxu0 0.0
  %521 = vmatpush1.msra.mxu0 0.0
  %522 = vmatprep.subr.mxu0 0.0
  %523 = vmatpush1.msra.mxu0 0.0
  %524 = vmatprep.subr.mxu0 0.0
  %525 = vmatpush1.msra.mxu0 0.0
  %526 = vmatprep.subr.mxu0 0.0
  %527 = vmatpush1.msra.mxu0 0.0
  %528 = vmatprep.mubr.f32.mxu0 0.0
  %v529 = vand.u32 %v55, 4294901760
  %530 = vmatmul.mubr.f32.gmra.mrb[0].mxu0 %v529
  %v531 = vpop.f32.mrb[0].mxu0
  %v532 = vadd.f32 %v433, %v531
  %v533 = vpop.f32.mrb[0].mxu0
  %534 = vmatprep.mubr.f32.mxu0 0.0
  %v535 = vand.u32 %v58, 4294901760
  %536 = vmatmul.mubr.f32.gmra.mrb[0].mxu0 %v535
  %v537 = vpop.f32.mrb[0].mxu0
  %v538 = vadd.f32 %v441, %v537
  %v539 = vpop.f32.mrb[0].mxu0
  %540 = vmatprep.mubr.f32.mxu0 0.0
  %v541 = vand.u32 %v61, 4294901760
  %542 = vmatmul.mubr.f32.gmra.mrb[0].mxu0 %v541
  %v543 = vpop.f32.mrb[0].mxu0
  %v544 = vadd.f32 %v449, %v543
  %v545 = vpop.f32.mrb[0].mxu0
  %546 = vmatprep.mubr.f32.mxu0 0.0
  %v547 = vand.u32 %v64, 4294901760
  %548 = vmatmul.mubr.f32.gmra.mrb[0].mxu0 %v547
  %v549 = vpop.f32.mrb[0].mxu0
  %v550 = vadd.f32 %v457, %v549
  %v551 = vpop.f32.mrb[0].mxu0
  %552 = vdwg.mxu0
  %553 = vmatprep.subr.mxu0 0.0
  %554 = vmatpush1.msra.mxu0 %v23
  %555 = vmatprep.subr.mxu0 0.0
  %556 = vmatpush1.msra.mxu0 %v24
  %557 = vmatprep.subr.mxu0 0.0
  %558 = vmatpush1.msra.mxu0 0.0
  %559 = vmatprep.subr.mxu0 0.0
  %560 = vmatpush1.msra.mxu0 0.0
  %561 = vmatprep.subr.mxu0 0.0
  %562 = vmatpush1.msra.mxu0 0.0
  %563 = vmatprep.subr.mxu0 0.0
  %564 = vmatpush1.msra.mxu0 0.0
  %565 = vmatprep.subr.mxu0 0.0
  %566 = vmatpush1.msra.mxu0 0.0
  %567 = vmatprep.subr.mxu0 0.0
  %568 = vmatpush1.msra.mxu0 0.0
  %569 = vmatprep.subr.mxu0 0.0
  %570 = vmatpush1.msra.mxu0 0.0
  %571 = vmatprep.subr.mxu0 0.0
  %572 = vmatpush1.msra.mxu0 0.0
  %573 = vmatprep.subr.mxu0 0.0
  %574 = vmatpush1.msra.mxu0 0.0
  %575 = vmatprep.subr.mxu0 0.0
  %576 = vmatpush1.msra.mxu0 0.0
  %577 = vmatprep.subr.mxu0 0.0
  %578 = vmatpush1.msra.mxu0 0.0
  %579 = vmatprep.subr.mxu0 0.0
  %580 = vmatpush1.msra.mxu0 0.0
  %581 = vmatprep.subr.mxu0 0.0
  %582 = vmatpush1.msra.mxu0 0.0
  %583 = vmatprep.subr.mxu0 0.0
  %584 = vmatpush1.msra.mxu0 0.0
  %585 = vmatprep.subr.mxu0 0.0
  %586 = vmatpush1.msra.mxu0 0.0
  %587 = vmatprep.subr.mxu0 0.0
  %588 = vmatpush1.msra.mxu0 0.0
  %589 = vmatprep.subr.mxu0 0.0
  %590 = vmatpush1.msra.mxu0 0.0
  %591 = vmatprep.subr.mxu0 0.0
  %592 = vmatpush1.msra.mxu0 0.0
  %593 = vmatprep.subr.mxu0 0.0
  %594 = vmatpush1.msra.mxu0 0.0
  %595 = vmatprep.subr.mxu0 0.0
  %596 = vmatpush1.msra.mxu0 0.0
  %597 = vmatprep.subr.mxu0 0.0
  %598 = vmatpush1.msra.mxu0 0.0
  %599 = vmatprep.subr.mxu0 0.0
  %600 = vmatpush1.msra.mxu0 0.0
  %601 = vmatprep.subr.mxu0 0.0
  %602 = vmatpush1.msra.mxu0 0.0
  %603 = vmatprep.subr.mxu0 0.0
  %604 = vmatpush1.msra.mxu0 0.0
  %605 = vmatprep.subr.mxu0 0.0
  %606 = vmatpush1.msra.mxu0 0.0
  %607 = vmatprep.subr.mxu0 0.0
  %608 = vmatpush1.msra.mxu0 0.0
  %609 = vmatprep.subr.mxu0 0.0
  %610 = vmatpush1.msra.mxu0 0.0
  %611 = vmatprep.subr.mxu0 0.0
  %612 = vmatpush1.msra.mxu0 0.0
  %613 = vmatprep.subr.mxu0 0.0
  %614 = vmatpush1.msra.mxu0 0.0
  %615 = vmatprep.subr.mxu0 0.0
  %616 = vmatpush1.msra.mxu0 0.0
  %617 = vmatprep.mubr.f32.mxu0 0.0
  %v618 = vand.u32 %v55, 4294901760
  %619 = vmatmul.mubr.f32.gmra.mrb[0].mxu0 %v618
  %v620 = vpop.f32.mrb[0].mxu0
  %v621 = vadd.f32 %v532, %v620
  %v622 = vpop.f32.mrb[0].mxu0
  %623 = vmatprep.mubr.f32.mxu0 0.0
  %v624 = vand.u32 %v58, 4294901760
  %625 = vmatmul.mubr.f32.gmra.mrb[0].mxu0 %v624
  %v626 = vpop.f32.mrb[0].mxu0
  %v627 = vadd.f32 %v538, %v626
  %v628 = vpop.f32.mrb[0].mxu0
  %629 = vmatprep.mubr.f32.mxu0 0.0
  %v630 = vand.u32 %v61, 4294901760
  %631 = vmatmul.mubr.f32.gmra.mrb[0].mxu0 %v630
  %v632 = vpop.f32.mrb[0].mxu0
  %v633 = vadd.f32 %v544, %v632
  %v634 = vpop.f32.mrb[0].mxu0
  %635 = vmatprep.mubr.f32.mxu0 0.0
  %v636 = vand.u32 %v64, 4294901760
  %637 = vmatmul.mubr.f32.gmra.mrb[0].mxu0 %v636
  %v638 = vpop.f32.mrb[0].mxu0
  %v639 = vadd.f32 %v550, %v638
  %v640 = vpop.f32.mrb[0].mxu0
  %641 = vdwg.mxu0
  %v642 = vmax.f32 %v621, 0.0
  %v643 = vmax.f32 %v627, 0.0
  %v644 = vmax.f32 %v633, 0.0
  %v645 = vmax.f32 %v639, 0.0
  %v646 = vld [vmem:[%s3] sm:$0xff]
  %v647 = vld [vmem:[%s3 + $0x8] sm:$0xff]
  %v648 = vld [vmem:[%s3 + $0x10] sm:$0xff]
  %v649 = vld [vmem:[%s3 + $0x18] sm:$0xff]
  %651 = vset.pattern.permute.xlu0 0
  %652 = vperm.xlu0 %651, %v646
  %v653 = vpop.permute.xlu0 %652
  %656 = vset.pattern.permute.xlu0 0
  %657 = vperm.xlu0 %656, %v647
  %v658 = vpop.permute.xlu0 %657
  %661 = vset.pattern.permute.xlu0 0
  %662 = vperm.xlu0 %661, %v648
  %v663 = vpop.permute.xlu0 %662
  %666 = vset.pattern.permute.xlu0 0
  %667 = vperm.xlu0 %666, %v649
  %v668 = vpop.permute.xlu0 %667
  %v670 = vmul.f32 %v642, %v653
  %v671 = vmul.f32 %v643, %v658
  %v672 = vmul.f32 %v644, %v663
  %v673 = vmul.f32 %v645, %v668
  %v674 = vadd.f32 %v670, %v671
  %v675 = vadd.f32 %v674, %v672
  %v676 = vadd.f32 %v675, %v673
  %v677 = vrot.slane %v676, 4
  %v678 = vadd.f32 %v676, %v677
  %v679 = vrot.slane %v678, 2
  %v680 = vadd.f32 %v678, %v679
  %v681 = vrot.slane %v680, 1
  %v682 = vadd.f32 %v680, %v681
  %s683 = sld [smem:[#allocation2]]
  %v684 = vstv %s683
  %v685 = vadd.f32 %v682, %v684
  %686 = vst [vmem:[%s5] sm:$0x1] %v685
  // Predicated region
  $region22: #{critic_net_forward.1} parent=0 // pred_check
    _
  $region23: #{critic_net_forward.1} parent=0 // pred_check_branch
    %688 = sbr.rel (0) target = $region25
  $region24: #{critic_net_forward.1} parent=0 // pred_region
    _
  $region25: #{critic_net_forward.1} parent=0 // pred_fallthru
    _
  // Predicated region
  $region26: #{critic_net_forward.1} parent=0 // pred_check
    _
  $region27: #{critic_net_forward.1} parent=0 // pred_check_branch
    %690 = sbr.rel (0) target = $region29
  $region28: #{critic_net_forward.1} parent=0 // pred_region
    _
  $region29: #{critic_net_forward.1} parent=0 // pred_fallthru
    _

</llo_original>
